<compile_context>
chip_gen: v7x
topology: tpu7x:2x2x1
jax: 0.10.0
libtpu: 0.0.40
codegen_flags: <defaults>
</compile_context>

<pallas_src>
import jax
import jax.numpy as jnp
from jax import lax
from jax.experimental import pallas as pl
from jax.experimental.pallas import tpu as pltpu


def _conv1x1_kernel(x_ref, w_ref, b_ref, o_ref):
    # x_ref: (1, C_in, TP)   w_ref: (C_out, C_in)   b_ref: (1, C_out)
    # o_ref: (1, TP, C_out)  <- the head's permute(0,2,3,1) is fused into this
    #                           output layout; no external transpose needed.
    x = x_ref[0]
    w = w_ref[...]
    # Resolve mixed precision without downcasting f32 weights: promote to the
    # common dtype (f32 x + f32 w -> f32 matmul; bf16 x + bf16 w -> bf16 MXU;
    # bf16 x + f32 w -> f32 matmul).  Accumulation is f32 either way.
    cd = jnp.promote_types(x.dtype, w.dtype)
    # Contract over C_in (lhs dim 0, rhs dim 1) -> (TP, C_out) directly.
    acc = lax.dot_general(
        x.astype(cd), w.astype(cd),
        dimension_numbers=(((0,), (1,)), ((), ())),
        preferred_element_type=jnp.float32)
    o_ref[0] = (acc + b_ref[...]).astype(o_ref.dtype)


def _round_up(x, m):
    return ((x + m - 1) // m) * m


def _pick_tile_p(p, c_in, dtype_bytes, *, vmem_budget_bytes=16 * 2**20,
                 max_tile=4096):
    """Pick the pixel tile (second-minor axis of the output block).

    Budget covers the double-buffered (C_in, tile_p) input tile, the dominant
    VMEM consumer.  Kept conservative so the same tile fits v7x (64 MiB VMEM,
    32 MiB scoped) as well as v5e/v6e — do not raise for v7x (review opt #4).
    """
    by_vmem = vmem_budget_bytes // (2 * c_in * dtype_bytes)
    tp = max(128, min(max_tile, (by_vmem // 128) * 128))
    if p <= tp:
        return p  # full-extent block is always layout-legal
    # v7x 2-TC balance: if this would yield exactly 2 uneven tiles per batch
    # slice (e.g. P=6400 -> 4096+2304), split into 2 near-equal 128-aligned
    # tiles (2x3200) so both TensorCores do the same work.  Neutral on
    # single-TC v5e/v6e.
    n_tiles = -(-p // tp)
    if n_tiles == 2:
        tp = max(128, _round_up(-(-p // 2), 128))
    return tp


def conv1x1_nchw_pallas(x_ncp, w, b, *, tile_p=None,
                        extra_input_buffering=False):
    """1x1 conv as a channel matmul; output already in channels-last layout.

    x_ncp : (N, C_in, P)   activations (P = H*W, contiguous reshape of NCHW)
    w     : (C_out, C_in)  conv weight (squeezed); kept in its own dtype
    b     : (C_out,)       conv bias
    returns (N, P, C_out)  == permute(0,2,3,1) of the NCHW conv output
    """
    N, C_in, P = x_ncp.shape
    C_out = w.shape[0]
    x_bytes = jnp.dtype(x_ncp.dtype).itemsize
    w_bytes = jnp.dtype(w.dtype).itemsize

    if tile_p is None:
        tile_p = _pick_tile_p(P, C_in, x_bytes)

    p_steps = -(-P // tile_p)
    grid = (N, p_steps)
    b2 = b.reshape(1, C_out).astype(jnp.float32)

    # Advisory cost for XLA scheduling around this mem-bound custom call.
    flops = 2 * N * P * C_in * C_out
    bytes_accessed = (x_bytes * N * P * C_in       # x read
                      + w_bytes * C_out * C_in     # w read
                      + 4 * C_out                  # bias read
                      + x_bytes * N * P * C_out)   # out write (fused layout)

    # VMEM: double-buffered input + output tiles, resident weight + bias.
    vmem_need = (2 * tile_p * C_in * x_bytes
                 + 2 * tile_p * C_out * x_bytes
                 + C_out * C_in * w_bytes + C_out * 4)
    vmem_limit = int(min(max(2 * vmem_need, 8 * 2**20), 32 * 2**20))

    # Review opt #7 (opt-in, "measure before keeping"): deeper input
    # pipelining for small C_in where per-step DMA issue latency dominates.
    x_spec_kwargs = {}
    if extra_input_buffering and C_in <= 64 and N * p_steps >= 4:
        x_spec_kwargs["pipeline_mode"] = pl.Buffered(3)
    x_spec = pl.BlockSpec((1, C_in, tile_p), lambda n, p: (n, 0, p),
                          **x_spec_kwargs)

    return pl.pallas_call(
        _conv1x1_kernel,
        out_shape=jax.ShapeDtypeStruct((N, P, C_out), x_ncp.dtype),
        grid_spec=pltpu.PrefetchScalarGridSpec(
            num_scalar_prefetch=0,
            grid=grid,
            in_specs=[
                # (1, C_in, tile_p): C_in full dim, tile_p lane-dense.
                x_spec,
                # Weight / bias resident across all grid steps.
                pl.BlockSpec((C_out, C_in), lambda n, p: (0, 0)),
                pl.BlockSpec((1, C_out), lambda n, p: (0, 0)),
            ],
            # Channels-last output block: DMA of (tile_p, C_out) into
            # (N, P, C_out) is fully contiguous; Pallas masks partial tails.
            out_specs=pl.BlockSpec((1, tile_p, C_out), lambda n, p: (n, p, 0)),
        ),
        compiler_params=pltpu.CompilerParams(
            # Both axes independent -> megacore sharding on v7x's 2 TCs.
            dimension_semantics=("parallel", "parallel"),
            vmem_limit_bytes=vmem_limit,
        ),
        cost_estimate=pl.CostEstimate(
            flops=flops, transcendentals=0, bytes_accessed=bytes_accessed),
    )(x_ncp, w, b2)


def landmark_head_forward(x_nchw, conv_w, conv_b, *, num_anchors=3,
                          tile_p=None):
    """Replicates LandmarkHead.forward.

    x_nchw : (N, C_in, H, W)
    conv_w : (C_out, C_in, 1, 1)   (PyTorch Conv2d weight layout)
    conv_b : (C_out,)
    returns: (N, H*W*num_anchors, 10)
    """
    N, C_in, H, W = x_nchw.shape
    C_out = conv_w.shape[0]
    assert C_out == num_anchors * 10

    # Free (contiguous) reshape: NCHW -> (N, C_in, P).  No input transpose.
    x_ncp = x_nchw.reshape(N, C_in, H * W)
    w_mat = conv_w.reshape(C_out, C_in)

    # Kernel output is already channels-last == permute(0,2,3,1).
    out_npc = conv1x1_nchw_pallas(x_ncp, w_mat, conv_b, tile_p=tile_p)

    # view(N, -1, 10): free reshape since C_out = num_anchors*10 is minor-most.
    return out_npc.reshape(N, H * W * num_anchors, 10)


def retinaface_heads_forward(x_nchw, class_w, class_b, bbox_w, bbox_b,
                             ldm_w, ldm_b, *, num_anchors=3, tile_p=None):
    """Optional fused Class/Bbox/Landmark heads (review opt #2).

    All three heads run a 1x1 conv over the SAME feature map; concatenating
    their weights along C_out (2A + 4A + 10A = 16A) lets one pallas_call read
    x from HBM once instead of three times (the kernel is HBM-read-bound).
    Returns (class, bbox, landmark) with the usual RetinaFace head shapes.
    """
    N, C_in, H, W = x_nchw.shape
    A = num_anchors
    P = H * W
    w_cat = jnp.concatenate([class_w.reshape(2 * A, C_in),
                             bbox_w.reshape(4 * A, C_in),
                             ldm_w.reshape(10 * A, C_in)], axis=0)
    b_cat = jnp.concatenate([class_b, bbox_b, ldm_b], axis=0)

    x_ncp = x_nchw.reshape(N, C_in, P)
    out = conv1x1_nchw_pallas(x_ncp, w_cat, b_cat, tile_p=tile_p)  # (N,P,16A)

    cls = out[..., : 2 * A].reshape(N, P * A, 2)
    box = out[..., 2 * A: 6 * A].reshape(N, P * A, 4)
    ldm = out[..., 6 * A:].reshape(N, P * A, 10)
    return cls, box, ldm


if __name__ == "__main__":
    # Small shapes consistent with the module (scaled-down inchannels).
    N, C_in, H, W = 2, 32, 16, 16
    num_anchors = 3
    C_out = num_anchors * 10

    key = jax.random.PRNGKey(0)
    kx, kw, kb, kcw, kcb, kbw, kbb = jax.random.split(key, 7)

    x = jax.random.normal(kx, (N, C_in, H, W), dtype=jnp.float32)
    conv_w = jax.random.normal(kw, (C_out, C_in, 1, 1), dtype=jnp.float32) * 0.05
    conv_b = jax.random.normal(kb, (C_out,), dtype=jnp.float32) * 0.05

    out = landmark_head_forward(x, conv_w, conv_b, num_anchors=num_anchors)
    out = jax.block_until_ready(out)

    w_mat = conv_w.reshape(C_out, C_in)
    ref = jnp.einsum("nchw,oc->nhwo", x, w_mat) + conv_b
    ref = ref.reshape(N, H * W * num_anchors, 10)
    assert out.shape == (N, H * W * num_anchors, 10)
    assert jnp.allclose(out, ref, atol=1e-4, rtol=1e-4)

    # Tail-handling check: spatial size (P=180) not a multiple of the pixel
    # tile (128) -> cdiv grid with a masked partial last block.
    H2, W2 = 12, 15
    x2 = jax.random.normal(jax.random.PRNGKey(1), (N, C_in, H2, W2),
                           dtype=jnp.float32)
    out2 = landmark_head_forward(x2, conv_w, conv_b, num_anchors=num_anchors,
                                 tile_p=128)
    out2 = jax.block_until_ready(out2)
    ref2 = jnp.einsum("nchw,oc->nhwo", x2, w_mat) + conv_b
    ref2 = ref2.reshape(N, H2 * W2 * num_anchors, 10)
    assert jnp.allclose(out2, ref2, atol=1e-4, rtol=1e-4)

    # Fused-heads check (opt #2): one kernel launch for Class/Bbox/Landmark.
    class_w = jax.random.normal(kcw, (2 * num_anchors, C_in, 1, 1),
                                dtype=jnp.float32) * 0.05
    class_b = jax.random.normal(kcb, (2 * num_anchors,), dtype=jnp.float32) * 0.05
    bbox_w = jax.random.normal(kbw, (4 * num_anchors, C_in, 1, 1),
                               dtype=jnp.float32) * 0.05
    bbox_b = jax.random.normal(kbb, (4 * num_anchors,), dtype=jnp.float32) * 0.05
    cls_o, box_o, ldm_o = retinaface_heads_forward(
        x, class_w, class_b, bbox_w, bbox_b, conv_w, conv_b,
        num_anchors=num_anchors)
    ldm_o = jax.block_until_ready(ldm_o)
    cls_ref = (jnp.einsum("nchw,oc->nhwo", x, class_w.reshape(2 * num_anchors, C_in))
               + class_b).reshape(N, H * W * num_anchors, 2)
    box_ref = (jnp.einsum("nchw,oc->nhwo", x, bbox_w.reshape(4 * num_anchors, C_in))
               + bbox_b).reshape(N, H * W * num_anchors, 4)
    assert jnp.allclose(cls_o, cls_ref, atol=1e-4, rtol=1e-4)
    assert jnp.allclose(box_o, box_ref, atol=1e-4, rtol=1e-4)
    assert jnp.allclose(ldm_o, ref, atol=1e-4, rtol=1e-4)

    # TODO(synk): bf16-activation fast path (opt #6) is a caller decision —
    # pass x.astype(jnp.bfloat16); accumulation/bias stay f32 in-kernel.

    print("KERNEL_OK")
</pallas_src>

<mosaic_0001>
module attributes {stable_mosaic.version = 11 : i64} {
  func.func @_conv1x1_kernel(%arg0: i32, %arg1: i32, %arg2: memref<1x32x256xf32, #tpu.memory_space<vmem>>, %arg3: memref<30x32xf32, #tpu.memory_space<vmem>>, %arg4: memref<1x30xf32, #tpu.memory_space<vmem>>, %arg5: memref<1x256x30xf32, #tpu.memory_space<vmem>>) attributes {dimension_semantics = [#tpu.dimension_semantics<parallel>, #tpu.dimension_semantics<parallel>], iteration_bounds = array<i64: 2, 1>, scalar_prefetch = 0 : i64, scratch_operands = 0 : i64, tpu.core_type = #tpu.core_type<tc>, window_params = [{transform_indices = @transform_0, window_bounds = array<i64: 1, 32, 256>}, {pipeline_mode = #tpu.pipeline_mode<synchronous>, transform_indices = @transform_1, window_bounds = array<i64: 30, 32>}, {pipeline_mode = #tpu.pipeline_mode<synchronous>, transform_indices = @transform_2, window_bounds = array<i64: 1, 30>}, {transform_indices = @transform_3, window_bounds = array<i64: 1, 256, 30>}]} {
    %c0 = arith.constant 0 : index
    %c0_0 = arith.constant 0 : index
    %c0_1 = arith.constant 0 : index
    %0 = vector.load %arg2[%c0, %c0_0, %c0_1] : memref<1x32x256xf32, #tpu.memory_space<vmem>>, vector<1x32x256xf32>
    %1 = vector.shape_cast %0 : vector<1x32x256xf32> to vector<32x256xf32>
    %c0_2 = arith.constant 0 : index
    %c0_3 = arith.constant 0 : index
    %2 = vector.load %arg3[%c0_2, %c0_3] : memref<30x32xf32, #tpu.memory_space<vmem>>, vector<30x32xf32>
    %cst = arith.constant dense<0.000000e+00> : vector<256x30xf32>
    %3 = tpu.matmul %1, %2, %cst {dimension_numbers = #tpu.dot_dimension_numbers<[0], [1], [1], [0], [0, 1, 1, 0], [], []>} : vector<32x256xf32>, vector<30x32xf32>, vector<256x30xf32> -> vector<256x30xf32>
    %c0_4 = arith.constant 0 : index
    %c0_5 = arith.constant 0 : index
    %4 = vector.load %arg4[%c0_4, %c0_5] : memref<1x30xf32, #tpu.memory_space<vmem>>, vector<1x30xf32>
    %5 = vector.broadcast %4 : vector<1x30xf32> to vector<256x30xf32>
    %6 = arith.addf %3, %5 : vector<256x30xf32>
    %c0_6 = arith.constant 0 : index
    %c0_7 = arith.constant 0 : index
    %c0_8 = arith.constant 0 : index
    %7 = vector.load %arg5[%c0_6, %c0_7, %c0_8] : memref<1x256x30xf32, #tpu.memory_space<vmem>>, vector<1x256x30xf32>
    %8 = vector.shape_cast %7 : vector<1x256x30xf32> to vector<256x30xf32>
    %9 = vector.shape_cast %6 : vector<256x30xf32> to vector<1x256x30xf32>
    tpu.vector_store %arg5[%c0_6, %c0_7, %c0_8], %9 {strides = array<i32>} : memref<1x256x30xf32, #tpu.memory_space<vmem>>, vector<1x256x30xf32>,
    return
  }
  func.func @transform_0(%arg0: i32, %arg1: i32) -> (i32, i32, i32) {
    %c0_i32 = arith.constant 0 : i32
    %c0_i32_0 = arith.constant 0 : i32
    return %arg0, %c0_i32, %arg1 : i32, i32, i32
  }
  func.func @transform_1(%arg0: i32, %arg1: i32) -> (i32, i32) {
    %c0_i32 = arith.constant 0 : i32
    %c0_i32_0 = arith.constant 0 : i32
    %c0_i32_1 = arith.constant 0 : i32
    return %c0_i32, %c0_i32_0 : i32, i32
  }
  func.func @transform_2(%arg0: i32, %arg1: i32) -> (i32, i32) {
    %c0_i32 = arith.constant 0 : i32
    %c0_i32_0 = arith.constant 0 : i32
    %c0_i32_1 = arith.constant 0 : i32
    return %c0_i32, %c0_i32_0 : i32, i32
  }
  func.func @transform_3(%arg0: i32, %arg1: i32) -> (i32, i32, i32) {
    %c0_i32 = arith.constant 0 : i32
    %c0_i32_0 = arith.constant 0 : i32
    return %arg0, %arg1, %c0_i32 : i32, i32, i32
  }
}

</mosaic_0001>

<llo_original>
// kernel: tpu_custom_call.1
$region0: #{tpu_custom_call.1}
  #allocation0 [shape = 'u32[]', space=smem, size = 0x4, offset = 0x4, fixed_abs, tag = 'smem constant byte address 0x4 - core index']
  #allocation1 [shape = 'u32[144,128]{1,0:T(1,128)}', space=vmem, size = 0x12000, scoped, tag = 'internal scratch']
  %s0 = inlined_call_operand.hbm [shape: f32[2,32,256], index: 0, kind: input, shape index: {}]
  %s1 = inlined_call_operand.hbm [shape: f32[30,32], index: 1, kind: input, shape index: {}]
  %s2 = inlined_call_operand.vmem [shape: f32[1,30], index: 2, kind: input, shape index: {}]
  %s3 = inlined_call_operand.vmem [shape: f32[2,256,30], index: 3, kind: output, shape index: {}]
  %s4 = sld [smem:[#allocation0]]
  $region53: #{tpu_custom_call.1} parent=0
    _
  %s6 = ssub.s32 1, %s4
  %s7 = scalar_select 0, %s6, %s4
  $region1: #{tpu_custom_call.1} parent=0
    #allocation2 [shape = 'u8[65536]{0}', space=vmem, size = 0x10000, scoped, tag = 'input window, operand 0']
    #allocation3 [shape = 's32[2]{0}', space=sflag, size = 0x8, scoped, tag = 'scoped memory for tpu_custom_call.1']
    #allocation4 [shape = 'u8[16384]{0}', space=vmem, size = 0x4000, scoped, tag = 'input window, operand 1, single buffered']
    #allocation5 [shape = 's32[1]{0}', space=sflag, size = 0x4, scoped, tag = 'scoped memory for tpu_custom_call.1']
    %8 = vsyncpa [#allocation3], 0
    %s9 = scalar_lea.sflag [#allocation3], 1
    %10 = vsyncpa %s9, 0
    %11 = vsyncpa [#allocation5], 0
    loop: start=0, step=1, limit=4
    $region2: #{tpu_custom_call.1} parent=1 // loop_pre_header
      _
    $region3: #{tpu_custom_call.1} parent=1 // loop_header
      %s13 = sphi 0, %s17
      %p14 = scmp.ge.s32.totalorder %s13, 4
      %s20 = sphi 0, %s32
      %s21 = sphi 0, %s28
      %s22 = sphi 0, %s20
      %s23 = sphi 0, %s21
      %s24 = sphi 0, %s22
      %s25 = sphi 0, %s23
      %s37 = sphi 0, %s39
      %s40 = sphi 0, %s37
      %s41 = sphi 0, %s40
      %s57 = sphi 0, %s41
      %s61 = sphi 0, %s61
      %s63 = sphi 0, %s61
      %s64 = sphi 0, %s63
      %s78 = sphi 0, %s64
      %s82 = sphi 0, %s82
      %s84 = sphi 0, %s82
      %s85 = sphi 0, %s84
      %s99 = sphi 0, %s85
      %s107 = sphi 0, %s109
      %s110 = sphi 0, %s107
      %s111 = sphi 0, %s110
      %s127 = sphi 0, %s111
    $region4: #{tpu_custom_call.1} parent=1 // loop_header_branch
      %16 = sbr.rel (%p14) target = $region8
    $region5: #{tpu_custom_call.1} parent=1 // loop_body
      %s18 = ssub.s32 %s13, 1
      %s19 = ssub.s32 %s13, 2
      %s26 = sadd.s32 1, %s21
      %p27 = scmp.ge.s32.totalorder %s26, 1
      %s28 = scalar_select %p27, 0, %s26
      %s29 = sadd.s32 1, %s20
      %s30 = scalar_select %p27, %s29, %s20
      %p31 = scmp.ge.s32.totalorder %s30, 2
      %s32 = scalar_select %p31, 0, %s30
      %s33 = ssub.s32 %s20, %s32
      %s34 = ssub.s32 %s21, %s28
      %s35 = sor.u32 %s33, %s34
      %p36 = scmp.eq.s32.totalorder %s35, 0
      %s38 = sadd.s32 %s37, 1
      %s39 = scalar_select %p36, %s37, %s38
      %p42 = pneg %p36
      %p43 = scmp.eq.s32.totalorder %s13, 1
      %p44 = por %p42, %p43
      %p45 = scmp.ne.s32.totalorder %s37, %s40
      %p46 = scmp.eq.s32.totalorder %s13, 0
      %p47 = por %p45, %p46
      %p48 = scmp.ne.s32.totalorder %s37, %s40
      %p49 = scmp.eq.s32.totalorder %s18, 1
      %p50 = por %p48, %p49
      %p51 = scmp.ne.s32.totalorder %s40, %s41
      %p52 = scmp.eq.s32.totalorder %s18, 0
      %p53 = por %p51, %p52
      %p54 = scmp.ne.s32.totalorder %s40, %s41
      %p55 = scmp.eq.s32.totalorder %s19, 1
      %p56 = por %p54, %p55
      %p58 = scmp.ne.s32.totalorder %s41, %s57
      %p59 = scmp.eq.s32.totalorder %s19, 0
      %p60 = por %p58, %p59
      %s62 = sadd.s32 %s61, 1
      %p65 = scmp.eq.s32.totalorder %s13, 1
      %p66 = scmp.ne.s32.totalorder %s61, %s63
      %p67 = scmp.eq.s32.totalorder %s13, 0
      %p68 = por %p66, %p67
      %p69 = scmp.ne.s32.totalorder %s61, %s63
      %p70 = scmp.eq.s32.totalorder %s18, 1
      %p71 = por %p69, %p70
      %p72 = scmp.ne.s32.totalorder %s63, %s64
      %p73 = scmp.eq.s32.totalorder %s18, 0
      %p74 = por %p72, %p73
      %p75 = scmp.ne.s32.totalorder %s63, %s64
      %p76 = scmp.eq.s32.totalorder %s19, 1
      %p77 = por %p75, %p76
      %p79 = scmp.ne.s32.totalorder %s64, %s78
      %p80 = scmp.eq.s32.totalorder %s19, 0
      %p81 = por %p79, %p80
      %s83 = sadd.s32 %s82, 1
      %p86 = scmp.eq.s32.totalorder %s13, 1
      %p87 = scmp.ne.s32.totalorder %s82, %s84
      %p88 = scmp.eq.s32.totalorder %s13, 0
      %p89 = por %p87, %p88
      %p90 = scmp.ne.s32.totalorder %s82, %s84
      %p91 = scmp.eq.s32.totalorder %s18, 1
      %p92 = por %p90, %p91
      %p93 = scmp.ne.s32.totalorder %s84, %s85
      %p94 = scmp.eq.s32.totalorder %s18, 0
      %p95 = por %p93, %p94
      %p96 = scmp.ne.s32.totalorder %s84, %s85
      %p97 = scmp.eq.s32.totalorder %s19, 1
      %p98 = por %p96, %p97
      %p100 = scmp.ne.s32.totalorder %s85, %s99
      %p101 = scmp.eq.s32.totalorder %s19, 0
      %p102 = por %p100, %p101
      %s103 = ssub.s32 %s20, %s32
      %s104 = ssub.s32 %s21, %s28
      %s105 = sor.u32 %s103, %s104
      %p106 = scmp.eq.s32.totalorder %s105, 0
      %s108 = sadd.s32 %s107, 1
      %s109 = scalar_select %p106, %s107, %s108
      %p112 = pneg %p106
      %p113 = scmp.eq.s32.totalorder %s13, 1
      %p114 = por %p112, %p113
      %p115 = scmp.ne.s32.totalorder %s107, %s110
      %p116 = scmp.eq.s32.totalorder %s13, 0
      %p117 = por %p115, %p116
      %p118 = scmp.ne.s32.totalorder %s107, %s110
      %p119 = scmp.eq.s32.totalorder %s18, 1
      %p120 = por %p118, %p119
      %p121 = scmp.ne.s32.totalorder %s110, %s111
      %p122 = scmp.eq.s32.totalorder %s18, 0
      %p123 = por %p121, %p122
      %p124 = scmp.ne.s32.totalorder %s110, %s111
      %p125 = scmp.eq.s32.totalorder %s19, 1
      %p126 = por %p124, %p125
      %p128 = scmp.ne.s32.totalorder %s111, %s127
      %p129 = scmp.eq.s32.totalorder %s19, 0
      %p130 = por %p128, %p129
      %p131 = scmp.le.s32.totalorder 1, %s13
      %p132 = scmp.lt.s32.totalorder %s13, 3
      %p133 = pnand %p131, %p132
      %p134 = pneg %p133
      // Predicated region
      $region9: #{tpu_custom_call.1} parent=5 // pred_check
        _
      $region10: #{tpu_custom_call.1} parent=5 // pred_check_branch
        %136 = sbr.rel (%p133) target = $region12
      $region11: #{tpu_custom_call.1} parent=5 // pred_region
        %s137 = ssub.s32 %s13, 1
        // Predicated region
        $region13: #{tpu_custom_call.1} parent=11 // pred_check
          %p138 = pneg %p74
        $region14: #{tpu_custom_call.1} parent=11 // pred_check_branch
          %140 = sbr.rel (%p138) target = $region16
        $region15: #{tpu_custom_call.1} parent=11 // pred_region
          %s142 = ssub.s32 512, 512
          %143 = vsyncadd [#allocation5], %s142
          %s144 = sshll.u32 [#allocation4], 4
          %s145 = int_to_ptr.vmem [resolvable:$true] %s144
          %150 = dma.hbm_to_vmem [thread:$0]  %s1, 512, %s145, [#allocation5], 128, 128, 8
        $region16: #{tpu_custom_call.1} parent=11 // pred_fallthru
          _
        // Predicated region
        $region17: #{tpu_custom_call.1} parent=11 // pred_check
          %p151 = pneg %p95
        $region18: #{tpu_custom_call.1} parent=11 // pred_check_branch
          %153 = sbr.rel (%p151) target = $region20
        $region19: #{tpu_custom_call.1} parent=11 // pred_region
          _
        $region20: #{tpu_custom_call.1} parent=11 // pred_fallthru
          _
      $region12: #{tpu_custom_call.1} parent=5 // pred_fallthru
        _
      %p154 = scmp.lt.s32.totalorder %s13, 2
      // Predicated region
      $region21: #{tpu_custom_call.1} parent=5 // pred_check
        %p155 = pneg %p154
      $region22: #{tpu_custom_call.1} parent=5 // pred_check_branch
        %157 = sbr.rel (%p155) target = $region24
      $region23: #{tpu_custom_call.1} parent=5 // pred_region
        // Predicated region
        $region25: #{tpu_custom_call.1} parent=23 // pred_check
          %p158 = pneg %p47
        $region26: #{tpu_custom_call.1} parent=23 // pred_check_branch
          %160 = sbr.rel (%p158) target = $region28
        $region27: #{tpu_custom_call.1} parent=23 // pred_region
          %s161 = sand.u32 %s37, 1
          %s162 = scalar_lea.sflag [#allocation3], %s161
          %s163 = sand.u32 %s37, 1
          %s164 = smul.addr %s163, 64
          %s165 = scalar_lea.vmem [#allocation2], %s164
          %s166 = smul.u32 2, %s21
          %s168 = ssub.s32 1024, 1024
          %169 = vsyncadd %s162, %s168
          %s170 = smul.addr %s20, 8
          %s171 = sadd.s32 %s166, %s170
          %s172 = smul.addr %s171, 128
          %s173 = scalar_lea.hbm %s0, %s172
          %s174 = sshll.u32 %s165, 4
          %s175 = int_to_ptr.vmem [resolvable:$true] %s174
          %180 = dma.hbm_to_vmem [thread:$0]  %s173, 1024, %s175, %s162, 256, 256, 16
        $region28: #{tpu_custom_call.1} parent=23 // pred_fallthru
          _
      $region24: #{tpu_custom_call.1} parent=5 // pred_fallthru
        _
      %p181 = scmp.le.s32.totalorder 1, %s13
      %p182 = scmp.lt.s32.totalorder %s13, 3
      %p183 = pnand %p181, %p182
      %p184 = pneg %p183
      // Predicated region
      $region29: #{tpu_custom_call.1} parent=5 // pred_check
        _
      $region30: #{tpu_custom_call.1} parent=5 // pred_check_branch
        %186 = sbr.rel (%p183) target = $region32
      $region31: #{tpu_custom_call.1} parent=5 // pred_region
        %s187 = ssub.s32 %s13, 1
        %s188 = sand.u32 %s40, 1
        %s189 = scalar_lea.sflag [#allocation3], %s188
        %s190 = sand.u32 %s40, 1
        %s191 = smul.addr %s190, 64
        %s192 = scalar_lea.vmem [#allocation2], %s191
        // Predicated region
        $region33: #{tpu_custom_call.1} parent=31 // pred_check
          %p193 = pneg %p53
        $region34: #{tpu_custom_call.1} parent=31 // pred_check_branch
          %195 = sbr.rel (%p193) target = $region36
        $region35: #{tpu_custom_call.1} parent=31 // pred_region
          %196 = dma.done %s189, 1024
        $region36: #{tpu_custom_call.1} parent=31 // pred_fallthru
          _
        // Predicated region
        $region37: #{tpu_custom_call.1} parent=31 // pred_check
          %p197 = pneg %p74
        $region38: #{tpu_custom_call.1} parent=31 // pred_check_branch
          %199 = sbr.rel (%p197) target = $region40
        $region39: #{tpu_custom_call.1} parent=31 // pred_region
          %200 = dma.done [#allocation5], 512
        $region40: #{tpu_custom_call.1} parent=31 // pred_fallthru
          _
        %s201 = sand.u32 %s40, 1
        %s202 = scalar_lea.sflag [#allocation3], %s201
        %s203 = sand.u32 %s40, 1
        %s204 = smul.addr %s203, 64
        %s205 = scalar_lea.vmem [#allocation2], %s204
        %p206 = pneg %p53
        %p207 = pneg %p50
        %p208 = pneg %p74
        %p209 = pneg %p71
        %p210 = pneg %p95
        %p211 = pneg %p92
        %p212 = pneg %p123
        %p213 = pneg %p120
        %s214 = smul.u32 32, %s23
        %p215 = scmp.lt.s32.totalorder %s22, 1
        %s216 = scalar_select %p215, %s22, 1
        %p217 = scmp.lt.s32.totalorder %s214, 31
        %s218 = scalar_select %p217, %s214, 31
        %s219 = smul.addr %s216, 32
        %s220 = sadd.s32 %s218, %s219
        %s221 = smul.addr %s220, 8
        %s222 = scalar_lea.vmem %s3, %s221
        %s223 = smul.u32 2, %s23
        %s224 = smul.u32 32, %s23
        %p225 = scmp.lt.s32.totalorder %s22, 1
        %s226 = scalar_select %p225, %s22, 1
        %p227 = scmp.lt.s32.totalorder %s224, 31
        %s228 = scalar_select %p227, %s224, 31
        %s229 = smul.addr %s226, 32
        %s230 = sadd.s32 %s228, %s229
        %s231 = smul.addr %s230, 8
        %s232 = scalar_lea.vmem %s3, %s231
        %s233 = smul.u32 32, %s23
        %v234 = vld [vmem:[%s192] sm:$0xff]
        %v235 = vld [vmem:[%s192 + $0x8] sm:$0xff]
        %v236 = vld [vmem:[%s192 + $0x10] sm:$0xff]
        %v237 = vld [vmem:[%s192 + $0x18] sm:$0xff]
        %v238 = vld [vmem:[%s192 + $0x20] sm:$0xff]
        %v239 = vld [vmem:[%s192 + $0x28] sm:$0xff]
        %v240 = vld [vmem:[%s192 + $0x30] sm:$0xff]
        %v241 = vld [vmem:[%s192 + $0x38] sm:$0xff]
        %v242 = vld [vmem:[#allocation4] sm:$0xff]
        %v243 = vld [vmem:[#allocation4 + $0x8] sm:$0xff]
        %v244 = vld [vmem:[#allocation4 + $0x10] sm:$0xff]
        %v245 = vld [vmem:[#allocation4 + $0x18] sm:$0x3f]
        %v246 = vld [vmem:[%s2] sm:$0x1]
        %v248 = vlaneseq
        %v249 = vshrl.u32 %v248, 7
        %v250 = vsub.s32 0, %v249
        %v251 = vrot.slane %v246, %v250
        %253 = vxpose.xlu0.b32.start [1/16] %v234, 128
        %254 = vxpose.xlu0.b32.cont [2/16] %v236, 128
        %255 = vxpose.xlu0.b32.cont [3/16] %v238, 128
        %256 = vxpose.xlu0.b32.cont [4/16] %v240, 128
        %257 = vxpose.xlu0.b32.cont [5/16] 0.0, 128
        %258 = vxpose.xlu0.b32.cont [6/16] 0.0, 128
        %259 = vxpose.xlu0.b32.cont [7/16] 0.0, 128
        %260 = vxpose.xlu0.b32.cont [8/16] 0.0, 128
        %261 = vxpose.xlu0.b32.cont [9/16] 0.0, 128
        %262 = vxpose.xlu0.b32.cont [10/16] 0.0, 128
        %263 = vxpose.xlu0.b32.cont [11/16] 0.0, 128
        %264 = vxpose.xlu0.b32.cont [12/16] 0.0, 128
        %265 = vxpose.xlu0.b32.cont [13/16] 0.0, 128
        %266 = vxpose.xlu0.b32.cont [14/16] 0.0, 128
        %267 = vxpose.xlu0.b32.cont [15/16] 0.0, 128
        %268 = vxpose.xlu0.b32.end [16/16] 0.0, 128
        %v269 = vpop.trf.xlu0
        %v270 = vpop.trf.xlu0
        %v271 = vpop.trf.xlu0
        %v272 = vpop.trf.xlu0
        %v273 = vpop.trf.xlu0
        %v274 = vpop.trf.xlu0
        %v275 = vpop.trf.xlu0
        %v276 = vpop.trf.xlu0
        %v277 = vpop.trf.xlu0
        %v278 = vpop.trf.xlu0
        %v279 = vpop.trf.xlu0
        %v280 = vpop.trf.xlu0
        %v281 = vpop.trf.xlu0
        %v282 = vpop.trf.xlu0
        %v283 = vpop.trf.xlu0
        %v284 = vpop.trf.xlu0
        %285 = vxpose.xlu0.b32.start [1/16] %v235, 128
        %286 = vxpose.xlu0.b32.cont [2/16] %v237, 128
        %287 = vxpose.xlu0.b32.cont [3/16] %v239, 128
        %288 = vxpose.xlu0.b32.cont [4/16] %v241, 128
        %289 = vxpose.xlu0.b32.cont [5/16] 0.0, 128
        %290 = vxpose.xlu0.b32.cont [6/16] 0.0, 128
        %291 = vxpose.xlu0.b32.cont [7/16] 0.0, 128
        %292 = vxpose.xlu0.b32.cont [8/16] 0.0, 128
        %293 = vxpose.xlu0.b32.cont [9/16] 0.0, 128
        %294 = vxpose.xlu0.b32.cont [10/16] 0.0, 128
        %295 = vxpose.xlu0.b32.cont [11/16] 0.0, 128
        %296 = vxpose.xlu0.b32.cont [12/16] 0.0, 128
        %297 = vxpose.xlu0.b32.cont [13/16] 0.0, 128
        %298 = vxpose.xlu0.b32.cont [14/16] 0.0, 128
        %299 = vxpose.xlu0.b32.cont [15/16] 0.0, 128
        %300 = vxpose.xlu0.b32.end [16/16] 0.0, 128
        %v301 = vpop.trf.xlu0
        %v302 = vpop.trf.xlu0
        %v303 = vpop.trf.xlu0
        %v304 = vpop.trf.xlu0
        %v305 = vpop.trf.xlu0
        %v306 = vpop.trf.xlu0
        %v307 = vpop.trf.xlu0
        %v308 = vpop.trf.xlu0
        %v309 = vpop.trf.xlu0
        %v310 = vpop.trf.xlu0
        %v311 = vpop.trf.xlu0
        %v312 = vpop.trf.xlu0
        %v313 = vpop.trf.xlu0
        %v314 = vpop.trf.xlu0
        %v315 = vpop.trf.xlu0
        %v316 = vpop.trf.xlu0
        %vm317 = vcmask 261120
        %v319 = vsel %vm317, %v269, 0
        %v322 = vsel %vm317, %v270, 0
        %v325 = vsel %vm317, %v271, 0
        %v328 = vsel %vm317, %v272, 0
        %v331 = vsel %vm317, %v273, 0
        %v334 = vsel %vm317, %v274, 0
        %v337 = vsel %vm317, %v275, 0
        %v340 = vsel %vm317, %v276, 0
        %v343 = vsel %vm317, %v277, 0
        %v346 = vsel %vm317, %v278, 0
        %v349 = vsel %vm317, %v279, 0
        %v352 = vsel %vm317, %v280, 0
        %v355 = vsel %vm317, %v281, 0
        %v358 = vsel %vm317, %v282, 0
        %v361 = vsel %vm317, %v283, 0
        %v364 = vsel %vm317, %v284, 0
        %v367 = vsel %vm317, %v301, 0
        %v370 = vsel %vm317, %v302, 0
        %v373 = vsel %vm317, %v303, 0
        %v376 = vsel %vm317, %v304, 0
        %v379 = vsel %vm317, %v305, 0
        %v382 = vsel %vm317, %v306, 0
        %v385 = vsel %vm317, %v307, 0
        %v388 = vsel %vm317, %v308, 0
        %v391 = vsel %vm317, %v309, 0
        %v394 = vsel %vm317, %v310, 0
        %v397 = vsel %vm317, %v311, 0
        %v400 = vsel %vm317, %v312, 0
        %v403 = vsel %vm317, %v313, 0
        %v406 = vsel %vm317, %v314, 0
        %v409 = vsel %vm317, %v315, 0
        %v412 = vsel %vm317, %v316, 0
        %v415 = vsel %vm317, %v242, 0
        %v418 = vsel %vm317, %v243, 0
        %v421 = vsel %vm317, %v244, 0
        %v424 = vsel %vm317, %v245, 0
        %426 = vmatprep.subr.mxu0 0.0
        %427 = vmatpush1.xpose.msra.mxu0 %v415
        %428 = vmatprep.subr.mxu0 0.0
        %429 = vmatpush1.xpose.msra.mxu0 %v418
        %430 = vmatprep.subr.mxu0 0.0
        %431 = vmatpush1.xpose.msra.mxu0 %v421
        %432 = vmatprep.subr.mxu0 0.0
        %433 = vmatpush1.xpose.msra.mxu0 %v424
        %434 = vmatprep.subr.mxu0 0.0
        %435 = vmatpush1.xpose.msra.mxu0 0.0
        %436 = vmatprep.subr.mxu0 0.0
        %437 = vmatpush1.xpose.msra.mxu0 0.0
        %438 = vmatprep.subr.mxu0 0.0
        %439 = vmatpush1.xpose.msra.mxu0 0.0
        %440 = vmatprep.subr.mxu0 0.0
        %441 = vmatpush1.xpose.msra.mxu0 0.0
        %442 = vmatprep.subr.mxu0 0.0
        %443 = vmatpush1.xpose.msra.mxu0 0.0
        %444 = vmatprep.subr.mxu0 0.0
        %445 = vmatpush1.xpose.msra.mxu0 0.0
        %446 = vmatprep.subr.mxu0 0.0
        %447 = vmatpush1.xpose.msra.mxu0 0.0
        %448 = vmatprep.subr.mxu0 0.0
        %449 = vmatpush1.xpose.msra.mxu0 0.0
        %450 = vmatprep.subr.mxu0 0.0
        %451 = vmatpush1.xpose.msra.mxu0 0.0
        %452 = vmatprep.subr.mxu0 0.0
        %453 = vmatpush1.xpose.msra.mxu0 0.0
        %454 = vmatprep.subr.mxu0 0.0
        %455 = vmatpush1.xpose.msra.mxu0 0.0
        %456 = vmatprep.subr.mxu0 0.0
        %457 = vmatpush1.xpose.msra.mxu0 0.0
        %458 = vmatprep.subr.mxu0 0.0
        %459 = vmatpush1.xpose.msra.mxu0 0.0
        %460 = vmatprep.subr.mxu0 0.0
        %461 = vmatpush1.xpose.msra.mxu0 0.0
        %462 = vmatprep.subr.mxu0 0.0
        %463 = vmatpush1.xpose.msra.mxu0 0.0
        %464 = vmatprep.subr.mxu0 0.0
        %465 = vmatpush1.xpose.msra.mxu0 0.0
        %466 = vmatprep.subr.mxu0 0.0
        %467 = vmatpush1.xpose.msra.mxu0 0.0
        %468 = vmatprep.subr.mxu0 0.0
        %469 = vmatpush1.xpose.msra.mxu0 0.0
        %470 = vmatprep.subr.mxu0 0.0
        %471 = vmatpush1.xpose.msra.mxu0 0.0
        %472 = vmatprep.subr.mxu0 0.0
        %473 = vmatpush1.xpose.msra.mxu0 0.0
        %474 = vmatprep.subr.mxu0 0.0
        %475 = vmatpush1.xpose.msra.mxu0 0.0
        %476 = vmatprep.subr.mxu0 0.0
        %477 = vmatpush1.xpose.msra.mxu0 0.0
        %478 = vmatprep.subr.mxu0 0.0
        %479 = vmatpush1.xpose.msra.mxu0 0.0
        %480 = vmatprep.subr.mxu0 0.0
        %481 = vmatpush1.xpose.msra.mxu0 0.0
        %482 = vmatprep.subr.mxu0 0.0
        %483 = vmatpush1.xpose.msra.mxu0 0.0
        %484 = vmatprep.subr.mxu0 0.0
        %485 = vmatpush1.xpose.msra.mxu0 0.0
        %486 = vmatprep.subr.mxu0 0.0
        %487 = vmatpush1.xpose.msra.mxu0 0.0
        %488 = vmatprep.subr.mxu0 0.0
        %489 = vmatpush1.xpose.msra.mxu0 0.0
        %490 = vmatprep.mubr.f32.mxu0 0.0
        %491 = vmatmul.mubr.f32.gmra.mrb[0].mxu0 %v319
        %v492 = vpop.f32.mrb[0].mxu0
        %v493 = vadd.f32 %v251, %v492
        %v494 = vpop.f32.mrb[0].mxu0
        %495 = vmatprep.mubr.f32.mxu0 0.0
        %496 = vmatmul.mubr.f32.gmra.mrb[0].mxu0 %v322
        %v497 = vpop.f32.mrb[0].mxu0
        %v498 = vadd.f32 %v251, %v497
        %v499 = vpop.f32.mrb[0].mxu0
        %500 = vmatprep.mubr.f32.mxu0 0.0
        %501 = vmatmul.mubr.f32.gmra.mrb[0].mxu0 %v325
        %v502 = vpop.f32.mrb[0].mxu0
        %v503 = vadd.f32 %v251, %v502
        %v504 = vpop.f32.mrb[0].mxu0
        %505 = vmatprep.mubr.f32.mxu0 0.0
        %506 = vmatmul.mubr.f32.gmra.mrb[0].mxu0 %v328
        %v507 = vpop.f32.mrb[0].mxu0
        %v508 = vadd.f32 %v251, %v507
        %v509 = vpop.f32.mrb[0].mxu0
        %510 = vmatprep.mubr.f32.mxu0 0.0
        %511 = vmatmul.mubr.f32.gmra.mrb[0].mxu0 %v331
        %v512 = vpop.f32.mrb[0].mxu0
        %v513 = vadd.f32 %v251, %v512
        %v514 = vpop.f32.mrb[0].mxu0
        %515 = vmatprep.mubr.f32.mxu0 0.0
        %516 = vmatmul.mubr.f32.gmra.mrb[0].mxu0 %v334
        %v517 = vpop.f32.mrb[0].mxu0
        %v518 = vadd.f32 %v251, %v517
        %v519 = vpop.f32.mrb[0].mxu0
        %520 = vmatprep.mubr.f32.mxu0 0.0
        %521 = vmatmul.mubr.f32.gmra.mrb[0].mxu0 %v337
        %v522 = vpop.f32.mrb[0].mxu0
        %v523 = vadd.f32 %v251, %v522
        %v524 = vpop.f32.mrb[0].mxu0
        %525 = vmatprep.mubr.f32.mxu0 0.0
        %526 = vmatmul.mubr.f32.gmra.mrb[0].mxu0 %v340
        %v527 = vpop.f32.mrb[0].mxu0
        %v528 = vadd.f32 %v251, %v527
        %v529 = vpop.f32.mrb[0].mxu0
        %530 = vmatprep.mubr.f32.mxu0 0.0
        %531 = vmatmul.mubr.f32.gmra.mrb[0].mxu0 %v343
        %v532 = vpop.f32.mrb[0].mxu0
        %v533 = vadd.f32 %v251, %v532
        %v534 = vpop.f32.mrb[0].mxu0
        %535 = vmatprep.mubr.f32.mxu0 0.0
        %536 = vmatmul.mubr.f32.gmra.mrb[0].mxu0 %v346
        %v537 = vpop.f32.mrb[0].mxu0
        %v538 = vadd.f32 %v251, %v537
        %v539 = vpop.f32.mrb[0].mxu0
        %540 = vmatprep.mubr.f32.mxu0 0.0
        %541 = vmatmul.mubr.f32.gmra.mrb[0].mxu0 %v349
        %v542 = vpop.f32.mrb[0].mxu0
        %v543 = vadd.f32 %v251, %v542
        %v544 = vpop.f32.mrb[0].mxu0
        %545 = vmatprep.mubr.f32.mxu0 0.0
        %546 = vmatmul.mubr.f32.gmra.mrb[0].mxu0 %v352
        %v547 = vpop.f32.mrb[0].mxu0
        %v548 = vadd.f32 %v251, %v547
        %v549 = vpop.f32.mrb[0].mxu0
        %550 = vmatprep.mubr.f32.mxu0 0.0
        %551 = vmatmul.mubr.f32.gmra.mrb[0].mxu0 %v355
        %v552 = vpop.f32.mrb[0].mxu0
        %v553 = vadd.f32 %v251, %v552
        %v554 = vpop.f32.mrb[0].mxu0
        %555 = vmatprep.mubr.f32.mxu0 0.0
        %556 = vmatmul.mubr.f32.gmra.mrb[0].mxu0 %v358
        %v557 = vpop.f32.mrb[0].mxu0
        %v558 = vadd.f32 %v251, %v557
        %v559 = vpop.f32.mrb[0].mxu0
        %560 = vmatprep.mubr.f32.mxu0 0.0
        %561 = vmatmul.mubr.f32.gmra.mrb[0].mxu0 %v361
        %v562 = vpop.f32.mrb[0].mxu0
        %v563 = vadd.f32 %v251, %v562
        %v564 = vpop.f32.mrb[0].mxu0
        %565 = vmatprep.mubr.f32.mxu0 0.0
        %566 = vmatmul.mubr.f32.gmra.mrb[0].mxu0 %v364
        %v567 = vpop.f32.mrb[0].mxu0
        %v568 = vadd.f32 %v251, %v567
        %v569 = vpop.f32.mrb[0].mxu0
        %570 = vmatprep.mubr.f32.mxu0 0.0
        %571 = vmatmul.mubr.f32.gmra.mrb[0].mxu0 %v367
        %v572 = vpop.f32.mrb[0].mxu0
        %v573 = vadd.f32 %v251, %v572
        %v574 = vpop.f32.mrb[0].mxu0
        %575 = vmatprep.mubr.f32.mxu0 0.0
        %576 = vmatmul.mubr.f32.gmra.mrb[0].mxu0 %v370
        %v577 = vpop.f32.mrb[0].mxu0
        %v578 = vadd.f32 %v251, %v577
        %v579 = vpop.f32.mrb[0].mxu0
        %580 = vmatprep.mubr.f32.mxu0 0.0
        %581 = vmatmul.mubr.f32.gmra.mrb[0].mxu0 %v373
        %v582 = vpop.f32.mrb[0].mxu0
        %v583 = vadd.f32 %v251, %v582
        %v584 = vpop.f32.mrb[0].mxu0
        %585 = vmatprep.mubr.f32.mxu0 0.0
        %586 = vmatmul.mubr.f32.gmra.mrb[0].mxu0 %v376
        %v587 = vpop.f32.mrb[0].mxu0
        %v588 = vadd.f32 %v251, %v587
        %v589 = vpop.f32.mrb[0].mxu0
        %590 = vmatprep.mubr.f32.mxu0 0.0
        %591 = vmatmul.mubr.f32.gmra.mrb[0].mxu0 %v379
        %v592 = vpop.f32.mrb[0].mxu0
        %v593 = vadd.f32 %v251, %v592
        %v594 = vpop.f32.mrb[0].mxu0
        %595 = vmatprep.mubr.f32.mxu0 0.0
        %596 = vmatmul.mubr.f32.gmra.mrb[0].mxu0 %v382
        %v597 = vpop.f32.mrb[0].mxu0
        %v598 = vadd.f32 %v251, %v597
        %v599 = vpop.f32.mrb[0].mxu0
        %600 = vmatprep.mubr.f32.mxu0 0.0
        %601 = vmatmul.mubr.f32.gmra.mrb[0].mxu0 %v385
        %v602 = vpop.f32.mrb[0].mxu0
        %v603 = vadd.f32 %v251, %v602
        %v604 = vpop.f32.mrb[0].mxu0
        %605 = vmatprep.mubr.f32.mxu0 0.0
        %606 = vmatmul.mubr.f32.gmra.mrb[0].mxu0 %v388
        %v607 = vpop.f32.mrb[0].mxu0
        %v608 = vadd.f32 %v251, %v607
        %v609 = vpop.f32.mrb[0].mxu0
        %610 = vmatprep.mubr.f32.mxu0 0.0
        %611 = vmatmul.mubr.f32.gmra.mrb[0].mxu0 %v391
        %v612 = vpop.f32.mrb[0].mxu0
        %v613 = vadd.f32 %v251, %v612
        %v614 = vpop.f32.mrb[0].mxu0
        %615 = vmatprep.mubr.f32.mxu0 0.0
        %616 = vmatmul.mubr.f32.gmra.mrb[0].mxu0 %v394
        %v617 = vpop.f32.mrb[0].mxu0
        %v618 = vadd.f32 %v251, %v617
        %v619 = vpop.f32.mrb[0].mxu0
        %620 = vmatprep.mubr.f32.mxu0 0.0
        %621 = vmatmul.mubr.f32.gmra.mrb[0].mxu0 %v397
        %v622 = vpop.f32.mrb[0].mxu0
        %v623 = vadd.f32 %v251, %v622
        %v624 = vpop.f32.mrb[0].mxu0
        %625 = vmatprep.mubr.f32.mxu0 0.0
        %626 = vmatmul.mubr.f32.gmra.mrb[0].mxu0 %v400
        %v627 = vpop.f32.mrb[0].mxu0
        %v628 = vadd.f32 %v251, %v627
        %v629 = vpop.f32.mrb[0].mxu0
        %630 = vmatprep.mubr.f32.mxu0 0.0
        %631 = vmatmul.mubr.f32.gmra.mrb[0].mxu0 %v403
        %v632 = vpop.f32.mrb[0].mxu0
        %v633 = vadd.f32 %v251, %v632
        %v634 = vpop.f32.mrb[0].mxu0
        %635 = vmatprep.mubr.f32.mxu0 0.0
        %636 = vmatmul.mubr.f32.gmra.mrb[0].mxu0 %v406
        %v637 = vpop.f32.mrb[0].mxu0
        %v638 = vadd.f32 %v251, %v637
        %v639 = vpop.f32.mrb[0].mxu0
        %640 = vmatprep.mubr.f32.mxu0 0.0
        %641 = vmatmul.mubr.f32.gmra.mrb[0].mxu0 %v409
        %v642 = vpop.f32.mrb[0].mxu0
        %v643 = vadd.f32 %v251, %v642
        %v644 = vpop.f32.mrb[0].mxu0
        %645 = vmatprep.mubr.f32.mxu0 0.0
        %646 = vmatmul.mubr.f32.gmra.mrb[0].mxu0 %v412
        %v647 = vpop.f32.mrb[0].mxu0
        %v648 = vadd.f32 %v251, %v647
        %v649 = vpop.f32.mrb[0].mxu0
        %650 = vdwg.mxu0
        %vm651 = vcmask 244736
        %652 = vst.msk [vmem:[%s232] sm:$0xff] %vm651, %v493
        %653 = vst.msk [vmem:[%s232 + $0x8] sm:$0xff] %vm651, %v498
        %654 = vst.msk [vmem:[%s232 + $0x10] sm:$0xff] %vm651, %v503
        %655 = vst.msk [vmem:[%s232 + $0x18] sm:$0xff] %vm651, %v508
        %656 = vst.msk [vmem:[%s232 + $0x20] sm:$0xff] %vm651, %v513
        %657 = vst.msk [vmem:[%s232 + $0x28] sm:$0xff] %vm651, %v518
        %658 = vst.msk [vmem:[%s232 + $0x30] sm:$0xff] %vm651, %v523
        %659 = vst.msk [vmem:[%s232 + $0x38] sm:$0xff] %vm651, %v528
        %660 = vst.msk [vmem:[%s232 + $0x40] sm:$0xff] %vm651, %v533
        %661 = vst.msk [vmem:[%s232 + $0x48] sm:$0xff] %vm651, %v538
        %662 = vst.msk [vmem:[%s232 + $0x50] sm:$0xff] %vm651, %v543
        %663 = vst.msk [vmem:[%s232 + $0x58] sm:$0xff] %vm651, %v548
        %664 = vst.msk [vmem:[%s232 + $0x60] sm:$0xff] %vm651, %v553
        %665 = vst.msk [vmem:[%s232 + $0x68] sm:$0xff] %vm651, %v558
        %666 = vst.msk [vmem:[%s232 + $0x70] sm:$0xff] %vm651, %v563
        %667 = vst.msk [vmem:[%s232 + $0x78] sm:$0xff] %vm651, %v568
        %668 = vst.msk [vmem:[%s232 + $0x80] sm:$0xff] %vm651, %v573
        %669 = vst.msk [vmem:[%s232 + $0x88] sm:$0xff] %vm651, %v578
        %670 = vst.msk [vmem:[%s232 + $0x90] sm:$0xff] %vm651, %v583
        %671 = vst.msk [vmem:[%s232 + $0x98] sm:$0xff] %vm651, %v588
        %672 = vst.msk [vmem:[%s232 + $0xa0] sm:$0xff] %vm651, %v593
        %673 = vst.msk [vmem:[%s232 + $0xa8] sm:$0xff] %vm651, %v598
        %674 = vst.msk [vmem:[%s232 + $0xb0] sm:$0xff] %vm651, %v603
        %675 = vst.msk [vmem:[%s232 + $0xb8] sm:$0xff] %vm651, %v608
        %676 = vst.msk [vmem:[%s232 + $0xc0] sm:$0xff] %vm651, %v613
        %677 = vst.msk [vmem:[%s232 + $0xc8] sm:$0xff] %vm651, %v618
        %678 = vst.msk [vmem:[%s232 + $0xd0] sm:$0xff] %vm651, %v623
        %679 = vst.msk [vmem:[%s232 + $0xd8] sm:$0xff] %vm651, %v628
        %680 = vst.msk [vmem:[%s232 + $0xe0] sm:$0xff] %vm651, %v633
        %681 = vst.msk [vmem:[%s232 + $0xe8] sm:$0xff] %vm651, %v638
        %682 = vst.msk [vmem:[%s232 + $0xf0] sm:$0xff] %vm651, %v643
        %683 = vst.msk [vmem:[%s232 + $0xf8] sm:$0xff] %vm651, %v648
        %s684 = smul.u32 32, %s23
        %p685 = scmp.lt.s32.totalorder %s22, 1
        %s686 = scalar_select %p685, %s22, 1
        %p687 = scmp.lt.s32.totalorder %s684, 31
        %s688 = scalar_select %p687, %s684, 31
        %s689 = smul.addr %s686, 32
        %s690 = sadd.s32 %s688, %s689
        %s691 = smul.addr %s690, 8
        %s692 = scalar_lea.vmem %s3, %s691
        // Predicated region
        $region41: #{tpu_custom_call.1} parent=31 // pred_check
          %p693 = pneg %p120
        $region42: #{tpu_custom_call.1} parent=31 // pred_check_branch
          %695 = sbr.rel (%p693) target = $region44
        $region43: #{tpu_custom_call.1} parent=31 // pred_region
          %s696 = smul.u32 32, %s23
        $region44: #{tpu_custom_call.1} parent=31 // pred_fallthru
          _
      $region32: #{tpu_custom_call.1} parent=5 // pred_fallthru
        _
      %p697 = scmp.le.s32.totalorder 2, %s13
      // Predicated region
      $region45: #{tpu_custom_call.1} parent=5 // pred_check
        %p698 = pneg %p697
      $region46: #{tpu_custom_call.1} parent=5 // pred_check_branch
        %700 = sbr.rel (%p698) target = $region48
      $region47: #{tpu_custom_call.1} parent=5 // pred_region
        %s701 = ssub.s32 %s13, 2
        // Predicated region
        $region49: #{tpu_custom_call.1} parent=47 // pred_check
          %p702 = pneg %p126
        $region50: #{tpu_custom_call.1} parent=47 // pred_check_branch
          %704 = sbr.rel (%p702) target = $region52
        $region51: #{tpu_custom_call.1} parent=47 // pred_region
          %s705 = smul.u32 32, %s25
          %p706 = scmp.lt.s32.totalorder %s24, 1
          %s707 = scalar_select %p706, %s24, 1
          %p708 = scmp.lt.s32.totalorder %s705, 31
          %s709 = scalar_select %p708, %s705, 31
          %s710 = smul.addr %s707, 32
          %s711 = sadd.s32 %s709, %s710
          %s712 = smul.addr %s711, 8
          %s713 = scalar_lea.vmem %s3, %s712
        $region52: #{tpu_custom_call.1} parent=47 // pred_fallthru
          _
      $region48: #{tpu_custom_call.1} parent=5 // pred_fallthru
        _
    $region6: #{tpu_custom_call.1} parent=1 // loop_footer
      %s17 = sadd.s32 1, %s13
    $region7: #{tpu_custom_call.1} parent=1 // loop_footer_branch
      %12 = sbr.rel target = $region3
    $region8: #{tpu_custom_call.1} parent=1 // loop_exit
      _
    %714 = vsyncpa [#allocation3], 1
    %s715 = scalar_lea.sflag [#allocation3], 1
    %716 = vsyncpa %s715, 1
    %717 = vsyncpa [#allocation5], 1

</llo_original>
